<compile_context>
chip_gen: v7x
topology: tpu7x:2x2x1
jax: 0.10.0
libtpu: 0.0.40
codegen_flags: <defaults>
</compile_context>

<pallas_src>
from functools import partial

import numpy as np
import jax
import jax.numpy as jnp
from jax.experimental import pallas as pl
from jax.experimental.pallas import tpu as pltpu

L = 3            # number of LISTA iterations (static, unrolled in-kernel)
BN_EPS = 1e-5
LANE = 128       # TPU vreg lane width


def lista_kernel(x_ref, ww_ref, sw_ref, params_ref, out_ref, *, n_valid, n_iters):
    # x_ref      : (input_dim, Npad)        -- lane-dense on N
    # ww_ref     : (output_dim, input_dim)
    # sw_ref     : (output_dim, output_dim)
    # params_ref : (output_dim, 4)  columns = [Wb + Sb, theta, gamma, beta]
    # out_ref    : (output_dim, Npad)
    X = x_ref[...]
    Ww = ww_ref[...]
    Sw = sw_ref[...]
    params = params_ref[...]
    bias = params[:, 0:1]                    # (out, 1)  == Wb + Sb
    theta = params[:, 1:2]                   # (out, 1)
    gamma = params[:, 2:3]                   # (out, 1)
    beta = params[:, 3:4]                    # (out, 1)

    out_dim, npad = out_ref.shape
    inv_n = jnp.float32(1.0 / n_valid)

    # Hoisted lane-broadcasts (re-used by every unrolled iteration; JAX does
    # not CSE broadcast_in_dim, so leaving them implicit re-emits them L times).
    hi = jnp.broadcast_to(theta, (out_dim, npad))      # (out, Npad)
    lo = -hi                                           # computed once

    # Mask out the padded columns from the BatchNorm statistics (only needed
    # when N was padded; padding never reaches the valid output columns since
    # the matmuls are column-wise independent along N).
    if n_valid == npad:
        mask = None
    else:
        col = jax.lax.broadcasted_iota(jnp.int32, (1, npad), 1)
        mask = jnp.broadcast_to((col < n_valid).astype(jnp.float32),
                                (out_dim, npad))       # hoisted, (out, Npad)

    def shrink(v):
        # Soft threshold: sign(v) * max(|v| - theta, 0)  ==  v - clip(v, -theta, theta)
        return v - jnp.minimum(jnp.maximum(v, lo), hi)

    def batchnorm(v):
        # Fused single-pass BN: sum and sum-of-squares together (one mask
        # multiply, reused), then one affine finalize v*a + b.
        if mask is None:
            s1 = jnp.sum(v, axis=1, keepdims=True)
            s2 = jnp.sum(v * v, axis=1, keepdims=True)
        else:
            vm = v * mask
            s1 = jnp.sum(vm, axis=1, keepdims=True)
            s2 = jnp.sum(v * vm, axis=1, keepdims=True)
        mean = s1 * inv_n
        # E[x^2] - E[x]^2 can go slightly negative from f32 cancellation: clamp.
        var = jnp.maximum(s2 * inv_n - mean * mean, 0.0)
        a = gamma * jax.lax.rsqrt(var + BN_EPS)        # (out, 1)
        b = beta - mean * a                            # (out, 1)
        return v * a + b

    # B' = Ww @ X + (Wb + Sb): Sb reappears in every iteration, fold it once.
    Bp = jnp.dot(Ww, X, preferred_element_type=jnp.float32) + bias    # (out, Npad)

    # Peeled iteration 0: Z == 0, so S(Z) + Sb + B == B'.
    Z = batchnorm(shrink(Bp))
    for _ in range(n_iters - 1):
        V = jnp.dot(Sw, Z, preferred_element_type=jnp.float32) + Bp
        Z = batchnorm(shrink(V))

    out_ref[...] = Z                                                   # (out, Npad)


def _vmem_limit_bytes():
    """Per-generation VMEM budget: ~7/8 of physical capacity.

    v5e/v6e (128 MiB physical) -> ~112 MiB; v7x (64 MiB physical) -> ~56 MiB.
    Falls back to a conservative 64 MiB-physical assumption if the query fails.
    """
    cap = None
    try:
        cap = getattr(pltpu.get_tpu_info(), "vmem_capacity_bytes", None)
    except Exception:
        cap = None
    if not cap:
        cap = 64 * 1024 * 1024
    return int(cap) * 7 // 8


def lista_forward(X, Ww, Wb, Sw, Sb, theta, gamma, beta, *, n_iters=L):
    input_dim, N = X.shape
    output_dim = Ww.shape[0]

    # Pad N to a lane-dense multiple of 128 (BN stats are masked in-kernel).
    # TODO(synk): for large N the pad + final slice are extra HBM copies; the
    # streamed N-tiled restructure (see module docstring) removes them.
    n_pad = max(LANE, ((N + LANE - 1) // LANE) * LANE)
    X_pad = jnp.pad(X, ((0, 0), (0, n_pad - N))) if n_pad != N else X

    # Pack the per-feature vectors into a single small operand: columns are
    # [Wb + Sb, theta, gamma, beta]  -> shape (output_dim, 4).
    params = jnp.stack([Wb + Sb, theta, gamma, beta], axis=1).astype(jnp.float32)

    vmem_limit = _vmem_limit_bytes()

    # Rough resident footprint of the single-block design (X, weights, params,
    # plus ~8 live (out, Npad) f32 temporaries: Bp, Z, V, hi, lo, mask, out, ...).
    resident = 4 * (input_dim * n_pad
                    + Ww.size + Sw.size + params.size
                    + 8 * output_dim * n_pad)
    if resident > vmem_limit:
        raise ValueError(
            f"LISTA single-block kernel needs ~{resident / 2**20:.1f} MiB VMEM "
            f"(> limit {vmem_limit / 2**20:.1f} MiB on this chip); N is too "
            "large for the resident design -- see TODO(synk) about the "
            "streamed N-tiled variant.")

    # Advisory cost estimate so XLA can schedule neighbouring ops around the call.
    flops = (2 * output_dim * input_dim * n_pad
             + (n_iters - 1) * 2 * output_dim * output_dim * n_pad
             + n_iters * 10 * output_dim * n_pad)
    bytes_accessed = 4 * (input_dim * n_pad + output_dim * n_pad
                          + Ww.size + Sw.size + params.size)
    cost = pl.CostEstimate(flops=int(flops),
                           transcendentals=int(n_iters * output_dim),
                           bytes_accessed=int(bytes_accessed))

    vmem = pl.BlockSpec(memory_space=pltpu.MemorySpace.VMEM)
    out = pl.pallas_call(
        partial(lista_kernel, n_valid=N, n_iters=n_iters),
        out_shape=jax.ShapeDtypeStruct((output_dim, n_pad), jnp.float32),
        in_specs=[vmem, vmem, vmem, vmem],
        out_specs=vmem,
        compiler_params=pltpu.CompilerParams(vmem_limit_bytes=vmem_limit),
        cost_estimate=cost,
    )(X_pad, Ww, Sw, params)
    return out[:, :N]


def lista_reference(X, Ww, Wb, Sw, Sb, theta, gamma, beta):
    """Pure-JAX reference mirroring the PyTorch forward (training-mode BN)."""
    B = X.T @ Ww.T + Wb
    Z = jnp.zeros_like(B)
    for _ in range(L):
        V = Z @ Sw.T + Sb + B
        V = jnp.sign(V) * jnp.maximum(jnp.abs(V) - theta, 0.0)
        mean = jnp.mean(V, axis=0, keepdims=True)
        var = jnp.mean((V - mean) ** 2, axis=0, keepdims=True)
        Z = (V - mean) / jnp.sqrt(var + BN_EPS) * gamma + beta
    return Z.T


if __name__ == "__main__":
    input_dim = 16
    output_dim = 32
    N = 8            # number of samples (X.shape[1])
    alpha = 0.5

    key = jax.random.PRNGKey(0)
    kx, kW_dict, kWw, kWb, kSw, kSb = jax.random.split(key, 6)

    # Input X: (input_dim, N)
    X = jax.random.normal(kx, (input_dim, N), dtype=jnp.float32)

    # Dictionary matrix W passed to __init__ (only used for the theta scale).
    W_dict = jax.random.normal(kW_dict, (output_dim, input_dim), dtype=jnp.float32)
    spec_norm = jnp.linalg.norm(W_dict, ord=2)       # largest singular value
    scale = 1.001 * spec_norm ** 2
    theta = jnp.full((output_dim,), alpha / scale, dtype=jnp.float32)

    # nn.Linear-style deterministic init: U(-1/sqrt(fan_in), 1/sqrt(fan_in))
    bw = 1.0 / np.sqrt(input_dim)
    Ww = jax.random.uniform(kWw, (output_dim, input_dim), jnp.float32, -bw, bw)
    Wb = jax.random.uniform(kWb, (output_dim,), jnp.float32, -bw, bw)
    bs = 1.0 / np.sqrt(output_dim)
    Sw = jax.random.uniform(kSw, (output_dim, output_dim), jnp.float32, -bs, bs)
    Sb = jax.random.uniform(kSb, (output_dim,), jnp.float32, -bs, bs)

    # Fresh BatchNorm1d parameters: gamma=1, beta=0.
    gamma = jnp.ones((output_dim,), dtype=jnp.float32)
    beta = jnp.zeros((output_dim,), dtype=jnp.float32)

    out = lista_forward(X, Ww, Wb, Sw, Sb, theta, gamma, beta)
    out = jax.block_until_ready(out)

    ref = lista_reference(X, Ww, Wb, Sw, Sb, theta, gamma, beta)
    np.testing.assert_allclose(np.asarray(out), np.asarray(ref), rtol=1e-4, atol=1e-4)

    print("KERNEL_OK")
</pallas_src>

<mosaic_0001>
module attributes {stable_mosaic.version = 11 : i64} {
  func.func @lista_kernel(%arg0: memref<16x128xf32, #tpu.memory_space<vmem>>, %arg1: memref<32x16xf32, #tpu.memory_space<vmem>>, %arg2: memref<32x32xf32, #tpu.memory_space<vmem>>, %arg3: memref<32x4xf32, #tpu.memory_space<vmem>>, %arg4: memref<32x128xf32, #tpu.memory_space<vmem>>) attributes {dimension_semantics = [], scalar_prefetch = 0 : i64, scratch_operands = 0 : i64, tpu.core_type = #tpu.core_type<tc>} {
    %c0 = arith.constant 0 : index
    %c0_0 = arith.constant 0 : index
    %0 = vector.load %arg0[%c0, %c0_0] : memref<16x128xf32, #tpu.memory_space<vmem>>, vector<16x128xf32>
    %c0_1 = arith.constant 0 : index
    %c0_2 = arith.constant 0 : index
    %1 = vector.load %arg1[%c0_1, %c0_2] : memref<32x16xf32, #tpu.memory_space<vmem>>, vector<32x16xf32>
    %c0_3 = arith.constant 0 : index
    %c0_4 = arith.constant 0 : index
    %2 = vector.load %arg2[%c0_3, %c0_4] : memref<32x32xf32, #tpu.memory_space<vmem>>, vector<32x32xf32>
    %c0_5 = arith.constant 0 : index
    %c0_6 = arith.constant 0 : index
    %3 = vector.load %arg3[%c0_5, %c0_6] : memref<32x4xf32, #tpu.memory_space<vmem>>, vector<32x4xf32>
    %4 = vector.extract_strided_slice %3 {offsets = [0, 0], sizes = [32, 1], strides = [1, 1]} : vector<32x4xf32> to vector<32x1xf32>
    %5 = vector.extract_strided_slice %3 {offsets = [0, 1], sizes = [32, 1], strides = [1, 1]} : vector<32x4xf32> to vector<32x1xf32>
    %6 = vector.extract_strided_slice %3 {offsets = [0, 2], sizes = [32, 1], strides = [1, 1]} : vector<32x4xf32> to vector<32x1xf32>
    %7 = vector.extract_strided_slice %3 {offsets = [0, 3], sizes = [32, 1], strides = [1, 1]} : vector<32x4xf32> to vector<32x1xf32>
    %8 = vector.shape_cast %5 : vector<32x1xf32> to vector<32x1xf32>
    %9 = vector.broadcast %8 : vector<32x1xf32> to vector<32x128xf32>
    %cst = arith.constant 0.000000e+00 : f32
    %10 = vector.broadcast %cst : f32 to vector<32x128xf32>
    %11 = arith.subf %10, %9 : vector<32x128xf32>
    %12 = tpu.iota {dimensions = array<i32: 1>} : vector<1x128xi32>
    %c8_i32 = arith.constant 8 : i32
    %13 = vector.broadcast %c8_i32 : i32 to vector<1x128xi32>
    %14 = arith.cmpi slt, %12, %13 : vector<1x128xi32>
    %15 = arith.extui %14 : vector<1x128xi1> to vector<1x128xi32>
    %16 = arith.sitofp %15 : vector<1x128xi32> to vector<1x128xf32>
    %17 = vector.shape_cast %16 : vector<1x128xf32> to vector<1x128xf32>
    %18 = vector.broadcast %17 : vector<1x128xf32> to vector<32x128xf32>
    %cst_7 = arith.constant dense<0.000000e+00> : vector<32x128xf32>
    %19 = tpu.matmul %1, %0, %cst_7 {dimension_numbers = #tpu.dot_dimension_numbers<[1], [0], [0], [1], [0, 0, 1, 1], [], []>} : vector<32x16xf32>, vector<16x128xf32>, vector<32x128xf32> -> vector<32x128xf32>
    %20 = vector.broadcast %4 : vector<32x1xf32> to vector<32x128xf32>
    %21 = arith.addf %19, %20 : vector<32x128xf32>
    %22 = arith.maximumf %21, %11 : vector<32x128xf32>
    %23 = arith.minimumf %22, %9 : vector<32x128xf32>
    %24 = arith.subf %21, %23 : vector<32x128xf32>
    %25 = arith.mulf %24, %18 : vector<32x128xf32>
    %cst_8 = arith.constant dense<0.000000e+00> : vector<32xf32>
    %26 = vector.multi_reduction <add>, %25, %cst_8 [1] : vector<32x128xf32> to vector<32xf32>
    %27 = vector.shape_cast %26 : vector<32xf32> to vector<32x1xf32>
    %28 = arith.mulf %24, %25 : vector<32x128xf32>
    %cst_9 = arith.constant dense<0.000000e+00> : vector<32xf32>
    %29 = vector.multi_reduction <add>, %28, %cst_9 [1] : vector<32x128xf32> to vector<32xf32>
    %30 = vector.shape_cast %29 : vector<32xf32> to vector<32x1xf32>
    %cst_10 = arith.constant 1.250000e-01 : f32
    %31 = vector.broadcast %cst_10 : f32 to vector<32x1xf32>
    %32 = arith.mulf %27, %31 : vector<32x1xf32>
    %cst_11 = arith.constant 1.250000e-01 : f32
    %33 = vector.broadcast %cst_11 : f32 to vector<32x1xf32>
    %34 = arith.mulf %30, %33 : vector<32x1xf32>
    %35 = arith.mulf %32, %32 : vector<32x1xf32>
    %36 = arith.subf %34, %35 : vector<32x1xf32>
    %cst_12 = arith.constant 0.000000e+00 : f32
    %37 = vector.broadcast %cst_12 : f32 to vector<32x1xf32>
    %38 = arith.maximumf %36, %37 : vector<32x1xf32>
    %cst_13 = arith.constant 9.99999974E-6 : f32
    %39 = vector.broadcast %cst_13 : f32 to vector<32x1xf32>
    %40 = arith.addf %38, %39 : vector<32x1xf32>
    %41 = math.rsqrt %40 : vector<32x1xf32>
    %42 = arith.mulf %6, %41 : vector<32x1xf32>
    %43 = arith.mulf %32, %42 : vector<32x1xf32>
    %44 = arith.subf %7, %43 : vector<32x1xf32>
    %45 = vector.broadcast %42 : vector<32x1xf32> to vector<32x128xf32>
    %46 = arith.mulf %24, %45 : vector<32x128xf32>
    %47 = vector.broadcast %44 : vector<32x1xf32> to vector<32x128xf32>
    %48 = arith.addf %46, %47 : vector<32x128xf32>
    %cst_14 = arith.constant dense<0.000000e+00> : vector<32x128xf32>
    %49 = tpu.matmul %2, %48, %cst_14 {dimension_numbers = #tpu.dot_dimension_numbers<[1], [0], [0], [1], [0, 0, 1, 1], [], []>} : vector<32x32xf32>, vector<32x128xf32>, vector<32x128xf32> -> vector<32x128xf32>
    %50 = arith.addf %49, %21 : vector<32x128xf32>
    %51 = arith.maximumf %50, %11 : vector<32x128xf32>
    %52 = arith.minimumf %51, %9 : vector<32x128xf32>
    %53 = arith.subf %50, %52 : vector<32x128xf32>
    %54 = arith.mulf %53, %18 : vector<32x128xf32>
    %cst_15 = arith.constant dense<0.000000e+00> : vector<32xf32>
    %55 = vector.multi_reduction <add>, %54, %cst_15 [1] : vector<32x128xf32> to vector<32xf32>
    %56 = vector.shape_cast %55 : vector<32xf32> to vector<32x1xf32>
    %57 = arith.mulf %53, %54 : vector<32x128xf32>
    %cst_16 = arith.constant dense<0.000000e+00> : vector<32xf32>
    %58 = vector.multi_reduction <add>, %57, %cst_16 [1] : vector<32x128xf32> to vector<32xf32>
    %59 = vector.shape_cast %58 : vector<32xf32> to vector<32x1xf32>
    %cst_17 = arith.constant 1.250000e-01 : f32
    %60 = vector.broadcast %cst_17 : f32 to vector<32x1xf32>
    %61 = arith.mulf %56, %60 : vector<32x1xf32>
    %cst_18 = arith.constant 1.250000e-01 : f32
    %62 = vector.broadcast %cst_18 : f32 to vector<32x1xf32>
    %63 = arith.mulf %59, %62 : vector<32x1xf32>
    %64 = arith.mulf %61, %61 : vector<32x1xf32>
    %65 = arith.subf %63, %64 : vector<32x1xf32>
    %cst_19 = arith.constant 0.000000e+00 : f32
    %66 = vector.broadcast %cst_19 : f32 to vector<32x1xf32>
    %67 = arith.maximumf %65, %66 : vector<32x1xf32>
    %cst_20 = arith.constant 9.99999974E-6 : f32
    %68 = vector.broadcast %cst_20 : f32 to vector<32x1xf32>
    %69 = arith.addf %67, %68 : vector<32x1xf32>
    %70 = math.rsqrt %69 : vector<32x1xf32>
    %71 = arith.mulf %6, %70 : vector<32x1xf32>
    %72 = arith.mulf %61, %71 : vector<32x1xf32>
    %73 = arith.subf %7, %72 : vector<32x1xf32>
    %74 = vector.broadcast %71 : vector<32x1xf32> to vector<32x128xf32>
    %75 = arith.mulf %53, %74 : vector<32x128xf32>
    %76 = vector.broadcast %73 : vector<32x1xf32> to vector<32x128xf32>
    %77 = arith.addf %75, %76 : vector<32x128xf32>
    %cst_21 = arith.constant dense<0.000000e+00> : vector<32x128xf32>
    %78 = tpu.matmul %2, %77, %cst_21 {dimension_numbers = #tpu.dot_dimension_numbers<[1], [0], [0], [1], [0, 0, 1, 1], [], []>} : vector<32x32xf32>, vector<32x128xf32>, vector<32x128xf32> -> vector<32x128xf32>
    %79 = arith.addf %78, %21 : vector<32x128xf32>
    %80 = arith.maximumf %79, %11 : vector<32x128xf32>
    %81 = arith.minimumf %80, %9 : vector<32x128xf32>
    %82 = arith.subf %79, %81 : vector<32x128xf32>
    %83 = arith.mulf %82, %18 : vector<32x128xf32>
    %cst_22 = arith.constant dense<0.000000e+00> : vector<32xf32>
    %84 = vector.multi_reduction <add>, %83, %cst_22 [1] : vector<32x128xf32> to vector<32xf32>
    %85 = vector.shape_cast %84 : vector<32xf32> to vector<32x1xf32>
    %86 = arith.mulf %82, %83 : vector<32x128xf32>
    %cst_23 = arith.constant dense<0.000000e+00> : vector<32xf32>
    %87 = vector.multi_reduction <add>, %86, %cst_23 [1] : vector<32x128xf32> to vector<32xf32>
    %88 = vector.shape_cast %87 : vector<32xf32> to vector<32x1xf32>
    %cst_24 = arith.constant 1.250000e-01 : f32
    %89 = vector.broadcast %cst_24 : f32 to vector<32x1xf32>
    %90 = arith.mulf %85, %89 : vector<32x1xf32>
    %cst_25 = arith.constant 1.250000e-01 : f32
    %91 = vector.broadcast %cst_25 : f32 to vector<32x1xf32>
    %92 = arith.mulf %88, %91 : vector<32x1xf32>
    %93 = arith.mulf %90, %90 : vector<32x1xf32>
    %94 = arith.subf %92, %93 : vector<32x1xf32>
    %cst_26 = arith.constant 0.000000e+00 : f32
    %95 = vector.broadcast %cst_26 : f32 to vector<32x1xf32>
    %96 = arith.maximumf %94, %95 : vector<32x1xf32>
    %cst_27 = arith.constant 9.99999974E-6 : f32
    %97 = vector.broadcast %cst_27 : f32 to vector<32x1xf32>
    %98 = arith.addf %96, %97 : vector<32x1xf32>
    %99 = math.rsqrt %98 : vector<32x1xf32>
    %100 = arith.mulf %6, %99 : vector<32x1xf32>
    %101 = arith.mulf %90, %100 : vector<32x1xf32>
    %102 = arith.subf %7, %101 : vector<32x1xf32>
    %103 = vector.broadcast %100 : vector<32x1xf32> to vector<32x128xf32>
    %104 = arith.mulf %82, %103 : vector<32x128xf32>
    %105 = vector.broadcast %102 : vector<32x1xf32> to vector<32x128xf32>
    %106 = arith.addf %104, %105 : vector<32x128xf32>
    %c0_28 = arith.constant 0 : index
    %c0_29 = arith.constant 0 : index
    %107 = vector.load %arg4[%c0_28, %c0_29] : memref<32x128xf32, #tpu.memory_space<vmem>>, vector<32x128xf32>
    tpu.vector_store %arg4[%c0_28, %c0_29], %106 {strides = array<i32>} : memref<32x128xf32, #tpu.memory_space<vmem>>, vector<32x128xf32>,
    return
  }
}

</mosaic_0001>

<llo_original>
// kernel: tpu_custom_call.1
$region0: #{tpu_custom_call.1}
  #allocation0 [shape = 'u32[]', space=smem, size = 0x4, offset = 0x4, fixed_abs, tag = 'smem constant byte address 0x4 - core index']
  #allocation1 [shape = 'u32[144,128]{1,0:T(1,128)}', space=vmem, size = 0x12000, scoped, tag = 'internal scratch']
  %s0 = inlined_call_operand.vmem [shape: f32[16,128], index: 0, kind: input, shape index: {}]
  %s1 = inlined_call_operand.vmem [shape: f32[32,16], index: 1, kind: input, shape index: {}]
  %s2 = inlined_call_operand.vmem [shape: f32[32,32], index: 2, kind: input, shape index: {}]
  %s3 = inlined_call_operand.vmem [shape: f32[32,4], index: 3, kind: input, shape index: {}]
  %s4 = inlined_call_operand.hbm [shape: f32[32,128], index: 4, kind: output, shape index: {}]
  %s5 = sld [smem:[#allocation0]]
  $region26: #{tpu_custom_call.1} parent=0
    _
  %s7 = ssub.s32 1, %s5
  %s8 = scalar_select 0, %s7, %s5
  $region1: #{tpu_custom_call.1} parent=0
    #allocation2 [shape = 'u8[16384]{0}', space=vmem, size = 0x4000, scoped, tag = 'output window, operand 0, single buffered']
    #allocation3 [shape = 's32[1]{0}', space=sflag, size = 0x4, scoped, tag = 'scoped memory for tpu_custom_call.1']
    %9 = vsyncpa [#allocation3], 0
    // Predicated region
    $region2: #{tpu_custom_call.1} parent=1 // pred_check
      _
    $region3: #{tpu_custom_call.1} parent=1 // pred_check_branch
      %11 = sbr.rel (0) target = $region5
    $region4: #{tpu_custom_call.1} parent=1 // pred_region
      _
    $region5: #{tpu_custom_call.1} parent=1 // pred_fallthru
      _
    // Predicated region
    $region6: #{tpu_custom_call.1} parent=1 // pred_check
      _
    $region7: #{tpu_custom_call.1} parent=1 // pred_check_branch
      %13 = sbr.rel (0) target = $region9
    $region8: #{tpu_custom_call.1} parent=1 // pred_region
      _
    $region9: #{tpu_custom_call.1} parent=1 // pred_fallthru
      _
    // Predicated region
    $region10: #{tpu_custom_call.1} parent=1 // pred_check
      _
    $region11: #{tpu_custom_call.1} parent=1 // pred_check_branch
      %15 = sbr.rel (0) target = $region13
    $region12: #{tpu_custom_call.1} parent=1 // pred_region
      _
    $region13: #{tpu_custom_call.1} parent=1 // pred_fallthru
      _
    // Predicated region
    $region14: #{tpu_custom_call.1} parent=1 // pred_check
      _
    $region15: #{tpu_custom_call.1} parent=1 // pred_check_branch
      %17 = sbr.rel (0) target = $region17
    $region16: #{tpu_custom_call.1} parent=1 // pred_region
      _
    $region17: #{tpu_custom_call.1} parent=1 // pred_fallthru
      _
    %v18 = vld [vmem:[%s0] sm:$0xff]
    %v19 = vld [vmem:[%s0 + $0x8] sm:$0xff]
    %v20 = vld [vmem:[%s1] sm:$0xff]
    %v21 = vld [vmem:[%s1 + $0x8] sm:$0xff]
    %v22 = vld [vmem:[%s1 + $0x10] sm:$0xff]
    %v23 = vld [vmem:[%s1 + $0x18] sm:$0xff]
    %v24 = vld [vmem:[%s2] sm:$0xff]
    %v25 = vld [vmem:[%s2 + $0x8] sm:$0xff]
    %v26 = vld [vmem:[%s2 + $0x10] sm:$0xff]
    %v27 = vld [vmem:[%s2 + $0x18] sm:$0xff]
    %v28 = vld [vmem:[%s3] sm:$0xff]
    %v29 = vld [vmem:[%s3 + $0x8] sm:$0xff]
    %v30 = vld [vmem:[%s3 + $0x10] sm:$0xff]
    %v31 = vld [vmem:[%s3 + $0x18] sm:$0xff]
    %33 = vset.pattern.permute.xlu0 1
    %34 = vperm.xlu0 %33, %v28
    %v35 = vpop.permute.xlu0 %34
    %38 = vset.pattern.permute.xlu0 1
    %39 = vperm.xlu0 %38, %v29
    %v40 = vpop.permute.xlu0 %39
    %43 = vset.pattern.permute.xlu0 1
    %44 = vperm.xlu0 %43, %v30
    %v45 = vpop.permute.xlu0 %44
    %48 = vset.pattern.permute.xlu0 1
    %49 = vperm.xlu0 %48, %v31
    %v50 = vpop.permute.xlu0 %49
    %v52 = vsub.f32 0.0, %v35
    %v53 = vsub.f32 0.0, %v40
    %v54 = vsub.f32 0.0, %v45
    %v55 = vsub.f32 0.0, %v50
    %v56 = vlaneseq
    %v57 = vand.u32 %v56, 127
    %vm58 = vcmp.lt.s32.totalorder %v57, 8
    %v59 = vsel %vm58, 1, 0
    %v60 = vcvt.s32.f32 %v59
    %61 = vset.pattern.permute.xlu0 0
    %62 = vperm.xlu0 %61, %v28
    %v63 = vpop.permute.xlu0 %62
    %65 = vset.pattern.permute.xlu0 0
    %66 = vperm.xlu0 %65, %v29
    %v67 = vpop.permute.xlu0 %66
    %69 = vset.pattern.permute.xlu0 0
    %70 = vperm.xlu0 %69, %v30
    %v71 = vpop.permute.xlu0 %70
    %73 = vset.pattern.permute.xlu0 0
    %74 = vperm.xlu0 %73, %v31
    %v75 = vpop.permute.xlu0 %74
    %vm77 = vcmask 130048
    %v79 = vsel %vm77, %v20, 0
    %v82 = vsel %vm77, %v21, 0
    %v85 = vsel %vm77, %v22, 0
    %v88 = vsel %vm77, %v23, 0
    %90 = vmatprep.subr.mxu0 0.0
    %91 = vmatpush1.msra.mxu0 %v18
    %92 = vmatprep.subr.mxu0 0.0
    %93 = vmatpush1.msra.mxu0 %v19
    %94 = vmatprep.subr.mxu0 0.0
    %95 = vmatpush1.msra.mxu0 0.0
    %96 = vmatprep.subr.mxu0 0.0
    %97 = vmatpush1.msra.mxu0 0.0
    %98 = vmatprep.subr.mxu0 0.0
    %99 = vmatpush1.msra.mxu0 0.0
    %100 = vmatprep.subr.mxu0 0.0
    %101 = vmatpush1.msra.mxu0 0.0
    %102 = vmatprep.subr.mxu0 0.0
    %103 = vmatpush1.msra.mxu0 0.0
    %104 = vmatprep.subr.mxu0 0.0
    %105 = vmatpush1.msra.mxu0 0.0
    %106 = vmatprep.subr.mxu0 0.0
    %107 = vmatpush1.msra.mxu0 0.0
    %108 = vmatprep.subr.mxu0 0.0
    %109 = vmatpush1.msra.mxu0 0.0
    %110 = vmatprep.subr.mxu0 0.0
    %111 = vmatpush1.msra.mxu0 0.0
    %112 = vmatprep.subr.mxu0 0.0
    %113 = vmatpush1.msra.mxu0 0.0
    %114 = vmatprep.subr.mxu0 0.0
    %115 = vmatpush1.msra.mxu0 0.0
    %116 = vmatprep.subr.mxu0 0.0
    %117 = vmatpush1.msra.mxu0 0.0
    %118 = vmatprep.subr.mxu0 0.0
    %119 = vmatpush1.msra.mxu0 0.0
    %120 = vmatprep.subr.mxu0 0.0
    %121 = vmatpush1.msra.mxu0 0.0
    %122 = vmatprep.subr.mxu0 0.0
    %123 = vmatpush1.msra.mxu0 0.0
    %124 = vmatprep.subr.mxu0 0.0
    %125 = vmatpush1.msra.mxu0 0.0
    %126 = vmatprep.subr.mxu0 0.0
    %127 = vmatpush1.msra.mxu0 0.0
    %128 = vmatprep.subr.mxu0 0.0
    %129 = vmatpush1.msra.mxu0 0.0
    %130 = vmatprep.subr.mxu0 0.0
    %131 = vmatpush1.msra.mxu0 0.0
    %132 = vmatprep.subr.mxu0 0.0
    %133 = vmatpush1.msra.mxu0 0.0
    %134 = vmatprep.subr.mxu0 0.0
    %135 = vmatpush1.msra.mxu0 0.0
    %136 = vmatprep.subr.mxu0 0.0
    %137 = vmatpush1.msra.mxu0 0.0
    %138 = vmatprep.subr.mxu0 0.0
    %139 = vmatpush1.msra.mxu0 0.0
    %140 = vmatprep.subr.mxu0 0.0
    %141 = vmatpush1.msra.mxu0 0.0
    %142 = vmatprep.subr.mxu0 0.0
    %143 = vmatpush1.msra.mxu0 0.0
    %144 = vmatprep.subr.mxu0 0.0
    %145 = vmatpush1.msra.mxu0 0.0
    %146 = vmatprep.subr.mxu0 0.0
    %147 = vmatpush1.msra.mxu0 0.0
    %148 = vmatprep.subr.mxu0 0.0
    %149 = vmatpush1.msra.mxu0 0.0
    %150 = vmatprep.subr.mxu0 0.0
    %151 = vmatpush1.msra.mxu0 0.0
    %152 = vmatprep.subr.mxu0 0.0
    %153 = vmatpush1.msra.mxu0 0.0
    %154 = vmatprep.mubr.f32.mxu0 0.0
    %155 = vmatmul.mubr.f32.gmra.mrb[0].mxu0 %v79
    %v156 = vpop.f32.mrb[0].mxu0
    %v157 = vadd.f32 %v63, %v156
    %v158 = vpop.f32.mrb[0].mxu0
    %159 = vmatprep.mubr.f32.mxu0 0.0
    %160 = vmatmul.mubr.f32.gmra.mrb[0].mxu0 %v82
    %v161 = vpop.f32.mrb[0].mxu0
    %v162 = vadd.f32 %v67, %v161
    %v163 = vpop.f32.mrb[0].mxu0
    %164 = vmatprep.mubr.f32.mxu0 0.0
    %165 = vmatmul.mubr.f32.gmra.mrb[0].mxu0 %v85
    %v166 = vpop.f32.mrb[0].mxu0
    %v167 = vadd.f32 %v71, %v166
    %v168 = vpop.f32.mrb[0].mxu0
    %169 = vmatprep.mubr.f32.mxu0 0.0
    %170 = vmatmul.mubr.f32.gmra.mrb[0].mxu0 %v88
    %v171 = vpop.f32.mrb[0].mxu0
    %v172 = vadd.f32 %v75, %v171
    %v173 = vpop.f32.mrb[0].mxu0
    %174 = vdwg.mxu0
    %v175 = vmax.f32 %v157, %v52
    %v176 = vmax.f32 %v162, %v53
    %v177 = vmax.f32 %v167, %v54
    %v178 = vmax.f32 %v172, %v55
    %v179 = vmin.f32 %v175, %v35
    %v180 = vmin.f32 %v176, %v40
    %v181 = vmin.f32 %v177, %v45
    %v182 = vmin.f32 %v178, %v50
    %v183 = vsub.f32 %v157, %v179
    %v184 = vsub.f32 %v162, %v180
    %v185 = vsub.f32 %v167, %v181
    %v186 = vsub.f32 %v172, %v182
    %v187 = vmul.f32 %v183, %v60
    %v188 = vmul.f32 %v184, %v60
    %v189 = vmul.f32 %v185, %v60
    %v190 = vmul.f32 %v186, %v60
    %191 = vadd.xlane.f32.xlu0 %v187
    %v192 = vpop.xlane.xlu0 %191
    %193 = vadd.xlane.f32.xlu0 %v188
    %v194 = vpop.xlane.xlu0 %193
    %195 = vadd.xlane.f32.xlu0 %v189
    %v196 = vpop.xlane.xlu0 %195
    %197 = vadd.xlane.f32.xlu0 %v190
    %v198 = vpop.xlane.xlu0 %197
    %v199 = vmul.f32 %v183, %v187
    %v200 = vmul.f32 %v184, %v188
    %v201 = vmul.f32 %v185, %v189
    %v202 = vmul.f32 %v186, %v190
    %203 = vadd.xlane.f32.xlu0 %v199
    %v204 = vpop.xlane.xlu0 %203
    %205 = vadd.xlane.f32.xlu0 %v200
    %v206 = vpop.xlane.xlu0 %205
    %207 = vadd.xlane.f32.xlu0 %v201
    %v208 = vpop.xlane.xlu0 %207
    %209 = vadd.xlane.f32.xlu0 %v202
    %v210 = vpop.xlane.xlu0 %209
    %v211 = vmul.f32 %v192, 0.125
    %v212 = vmul.f32 %v194, 0.125
    %v213 = vmul.f32 %v196, 0.125
    %v214 = vmul.f32 %v198, 0.125
    %v215 = vmul.f32 %v204, 0.125
    %v216 = vmul.f32 %v206, 0.125
    %v217 = vmul.f32 %v208, 0.125
    %v218 = vmul.f32 %v210, 0.125
    %v219 = vmul.f32 %v211, %v211
    %v220 = vmul.f32 %v212, %v212
    %v221 = vmul.f32 %v213, %v213
    %v222 = vmul.f32 %v214, %v214
    %v223 = vsub.f32 %v215, %v219
    %v224 = vsub.f32 %v216, %v220
    %v225 = vsub.f32 %v217, %v221
    %v226 = vsub.f32 %v218, %v222
    %v227 = vmax.f32 %v223, 0.0
    %v228 = vmax.f32 %v224, 0.0
    %v229 = vmax.f32 %v225, 0.0
    %v230 = vmax.f32 %v226, 0.0
    %v231 = vadd.f32 %v227, 1e-05
    %v232 = vadd.f32 %v228, 1e-05
    %v233 = vadd.f32 %v229, 1e-05
    %v234 = vadd.f32 %v230, 1e-05
    %v235 = vrsqrt.pop %v231
    %v236 = vrsqrt.pop %v232
    %v237 = vrsqrt.pop %v233
    %v238 = vrsqrt.pop %v234
    %v239 = vmul.f32 %v28, %v235
    %v240 = vmul.f32 %v29, %v236
    %v241 = vmul.f32 %v30, %v237
    %v242 = vmul.f32 %v31, %v238
    %v243 = vmul.f32 %v211, %v239
    %v244 = vmul.f32 %v212, %v240
    %v245 = vmul.f32 %v213, %v241
    %v246 = vmul.f32 %v214, %v242
    %251 = vrot.lane.b32.xlu0 %v243, 1
    %v252 = vpop.permute.xlu0 %251
    %253 = vrot.lane.b32.xlu0 %v244, 1
    %v254 = vpop.permute.xlu0 %253
    %255 = vrot.lane.b32.xlu0 %v245, 1
    %v256 = vpop.permute.xlu0 %255
    %257 = vrot.lane.b32.xlu0 %v246, 1
    %v258 = vpop.permute.xlu0 %257
    %v263 = vsub.f32 %v28, %v252
    %v264 = vsub.f32 %v29, %v254
    %v265 = vsub.f32 %v30, %v256
    %v266 = vsub.f32 %v31, %v258
    %268 = vset.pattern.permute.xlu0 2
    %269 = vperm.xlu0 %268, %v239
    %v270 = vpop.permute.xlu0 %269
    %273 = vset.pattern.permute.xlu0 2
    %274 = vperm.xlu0 %273, %v240
    %v275 = vpop.permute.xlu0 %274
    %278 = vset.pattern.permute.xlu0 2
    %279 = vperm.xlu0 %278, %v241
    %v280 = vpop.permute.xlu0 %279
    %283 = vset.pattern.permute.xlu0 2
    %284 = vperm.xlu0 %283, %v242
    %v285 = vpop.permute.xlu0 %284
    %v287 = vmul.f32 %v183, %v270
    %v288 = vmul.f32 %v184, %v275
    %v289 = vmul.f32 %v185, %v280
    %v290 = vmul.f32 %v186, %v285
    %292 = vset.pattern.permute.xlu0 3
    %293 = vperm.xlu0 %292, %v263
    %v294 = vpop.permute.xlu0 %293
    %297 = vset.pattern.permute.xlu0 3
    %298 = vperm.xlu0 %297, %v264
    %v299 = vpop.permute.xlu0 %298
    %302 = vset.pattern.permute.xlu0 3
    %303 = vperm.xlu0 %302, %v265
    %v304 = vpop.permute.xlu0 %303
    %307 = vset.pattern.permute.xlu0 3
    %308 = vperm.xlu0 %307, %v266
    %v309 = vpop.permute.xlu0 %308
    %v311 = vadd.f32 %v287, %v294
    %v312 = vadd.f32 %v288, %v299
    %v313 = vadd.f32 %v289, %v304
    %v314 = vadd.f32 %v290, %v309
    %vm315 = vcmask 261120
    %v317 = vsel %vm315, %v24, 0
    %v320 = vsel %vm315, %v25, 0
    %v323 = vsel %vm315, %v26, 0
    %v326 = vsel %vm315, %v27, 0
    %328 = vmatprep.subr.mxu0 0.0
    %329 = vmatpush1.msra.mxu0 %v311
    %330 = vmatprep.subr.mxu0 0.0
    %331 = vmatpush1.msra.mxu0 %v312
    %332 = vmatprep.subr.mxu0 0.0
    %333 = vmatpush1.msra.mxu0 %v313
    %334 = vmatprep.subr.mxu0 0.0
    %335 = vmatpush1.msra.mxu0 %v314
    %336 = vmatprep.subr.mxu0 0.0
    %337 = vmatpush1.msra.mxu0 0.0
    %338 = vmatprep.subr.mxu0 0.0
    %339 = vmatpush1.msra.mxu0 0.0
    %340 = vmatprep.subr.mxu0 0.0
    %341 = vmatpush1.msra.mxu0 0.0
    %342 = vmatprep.subr.mxu0 0.0
    %343 = vmatpush1.msra.mxu0 0.0
    %344 = vmatprep.subr.mxu0 0.0
    %345 = vmatpush1.msra.mxu0 0.0
    %346 = vmatprep.subr.mxu0 0.0
    %347 = vmatpush1.msra.mxu0 0.0
    %348 = vmatprep.subr.mxu0 0.0
    %349 = vmatpush1.msra.mxu0 0.0
    %350 = vmatprep.subr.mxu0 0.0
    %351 = vmatpush1.msra.mxu0 0.0
    %352 = vmatprep.subr.mxu0 0.0
    %353 = vmatpush1.msra.mxu0 0.0
    %354 = vmatprep.subr.mxu0 0.0
    %355 = vmatpush1.msra.mxu0 0.0
    %356 = vmatprep.subr.mxu0 0.0
    %357 = vmatpush1.msra.mxu0 0.0
    %358 = vmatprep.subr.mxu0 0.0
    %359 = vmatpush1.msra.mxu0 0.0
    %360 = vmatprep.subr.mxu0 0.0
    %361 = vmatpush1.msra.mxu0 0.0
    %362 = vmatprep.subr.mxu0 0.0
    %363 = vmatpush1.msra.mxu0 0.0
    %364 = vmatprep.subr.mxu0 0.0
    %365 = vmatpush1.msra.mxu0 0.0
    %366 = vmatprep.subr.mxu0 0.0
    %367 = vmatpush1.msra.mxu0 0.0
    %368 = vmatprep.subr.mxu0 0.0
    %369 = vmatpush1.msra.mxu0 0.0
    %370 = vmatprep.subr.mxu0 0.0
    %371 = vmatpush1.msra.mxu0 0.0
    %372 = vmatprep.subr.mxu0 0.0
    %373 = vmatpush1.msra.mxu0 0.0
    %374 = vmatprep.subr.mxu0 0.0
    %375 = vmatpush1.msra.mxu0 0.0
    %376 = vmatprep.subr.mxu0 0.0
    %377 = vmatpush1.msra.mxu0 0.0
    %378 = vmatprep.subr.mxu0 0.0
    %379 = vmatpush1.msra.mxu0 0.0
    %380 = vmatprep.subr.mxu0 0.0
    %381 = vmatpush1.msra.mxu0 0.0
    %382 = vmatprep.subr.mxu0 0.0
    %383 = vmatpush1.msra.mxu0 0.0
    %384 = vmatprep.subr.mxu0 0.0
    %385 = vmatpush1.msra.mxu0 0.0
    %386 = vmatprep.subr.mxu0 0.0
    %387 = vmatpush1.msra.mxu0 0.0
    %388 = vmatprep.subr.mxu0 0.0
    %389 = vmatpush1.msra.mxu0 0.0
    %390 = vmatprep.subr.mxu0 0.0
    %391 = vmatpush1.msra.mxu0 0.0
    %392 = vmatprep.mubr.f32.mxu0 0.0
    %393 = vmatmul.mubr.f32.gmra.mrb[0].mxu0 %v317
    %v394 = vpop.f32.mrb[0].mxu0
    %v395 = vadd.f32 %v157, %v394
    %v396 = vpop.f32.mrb[0].mxu0
    %397 = vmatprep.mubr.f32.mxu0 0.0
    %398 = vmatmul.mubr.f32.gmra.mrb[0].mxu0 %v320
    %v399 = vpop.f32.mrb[0].mxu0
    %v400 = vadd.f32 %v162, %v399
    %v401 = vpop.f32.mrb[0].mxu0
    %402 = vmatprep.mubr.f32.mxu0 0.0
    %403 = vmatmul.mubr.f32.gmra.mrb[0].mxu0 %v323
    %v404 = vpop.f32.mrb[0].mxu0
    %v405 = vadd.f32 %v167, %v404
    %v406 = vpop.f32.mrb[0].mxu0
    %407 = vmatprep.mubr.f32.mxu0 0.0
    %408 = vmatmul.mubr.f32.gmra.mrb[0].mxu0 %v326
    %v409 = vpop.f32.mrb[0].mxu0
    %v410 = vadd.f32 %v172, %v409
    %v411 = vpop.f32.mrb[0].mxu0
    %412 = vdwg.mxu0
    %v413 = vmax.f32 %v395, %v52
    %v414 = vmax.f32 %v400, %v53
    %v415 = vmax.f32 %v405, %v54
    %v416 = vmax.f32 %v410, %v55
    %v417 = vmin.f32 %v413, %v35
    %v418 = vmin.f32 %v414, %v40
    %v419 = vmin.f32 %v415, %v45
    %v420 = vmin.f32 %v416, %v50
    %v421 = vsub.f32 %v395, %v417
    %v422 = vsub.f32 %v400, %v418
    %v423 = vsub.f32 %v405, %v419
    %v424 = vsub.f32 %v410, %v420
    %v425 = vmul.f32 %v421, %v60
    %v426 = vmul.f32 %v422, %v60
    %v427 = vmul.f32 %v423, %v60
    %v428 = vmul.f32 %v424, %v60
    %429 = vadd.xlane.f32.xlu0 %v425
    %v430 = vpop.xlane.xlu0 %429
    %431 = vadd.xlane.f32.xlu0 %v426
    %v432 = vpop.xlane.xlu0 %431
    %433 = vadd.xlane.f32.xlu0 %v427
    %v434 = vpop.xlane.xlu0 %433
    %435 = vadd.xlane.f32.xlu0 %v428
    %v436 = vpop.xlane.xlu0 %435
    %v437 = vmul.f32 %v421, %v425
    %v438 = vmul.f32 %v422, %v426
    %v439 = vmul.f32 %v423, %v427
    %v440 = vmul.f32 %v424, %v428
    %441 = vadd.xlane.f32.xlu0 %v437
    %v442 = vpop.xlane.xlu0 %441
    %443 = vadd.xlane.f32.xlu0 %v438
    %v444 = vpop.xlane.xlu0 %443
    %445 = vadd.xlane.f32.xlu0 %v439
    %v446 = vpop.xlane.xlu0 %445
    %447 = vadd.xlane.f32.xlu0 %v440
    %v448 = vpop.xlane.xlu0 %447
    %v449 = vmul.f32 %v430, 0.125
    %v450 = vmul.f32 %v432, 0.125
    %v451 = vmul.f32 %v434, 0.125
    %v452 = vmul.f32 %v436, 0.125
    %v453 = vmul.f32 %v442, 0.125
    %v454 = vmul.f32 %v444, 0.125
    %v455 = vmul.f32 %v446, 0.125
    %v456 = vmul.f32 %v448, 0.125
    %v457 = vmul.f32 %v449, %v449
    %v458 = vmul.f32 %v450, %v450
    %v459 = vmul.f32 %v451, %v451
    %v460 = vmul.f32 %v452, %v452
    %v461 = vsub.f32 %v453, %v457
    %v462 = vsub.f32 %v454, %v458
    %v463 = vsub.f32 %v455, %v459
    %v464 = vsub.f32 %v456, %v460
    %v465 = vmax.f32 %v461, 0.0
    %v466 = vmax.f32 %v462, 0.0
    %v467 = vmax.f32 %v463, 0.0
    %v468 = vmax.f32 %v464, 0.0
    %v469 = vadd.f32 %v465, 1e-05
    %v470 = vadd.f32 %v466, 1e-05
    %v471 = vadd.f32 %v467, 1e-05
    %v472 = vadd.f32 %v468, 1e-05
    %v473 = vrsqrt.pop %v469
    %v474 = vrsqrt.pop %v470
    %v475 = vrsqrt.pop %v471
    %v476 = vrsqrt.pop %v472
    %v477 = vmul.f32 %v28, %v473
    %v478 = vmul.f32 %v29, %v474
    %v479 = vmul.f32 %v30, %v475
    %v480 = vmul.f32 %v31, %v476
    %v481 = vmul.f32 %v449, %v477
    %v482 = vmul.f32 %v450, %v478
    %v483 = vmul.f32 %v451, %v479
    %v484 = vmul.f32 %v452, %v480
    %489 = vrot.lane.b32.xlu0 %v481, 1
    %v490 = vpop.permute.xlu0 %489
    %491 = vrot.lane.b32.xlu0 %v482, 1
    %v492 = vpop.permute.xlu0 %491
    %493 = vrot.lane.b32.xlu0 %v483, 1
    %v494 = vpop.permute.xlu0 %493
    %495 = vrot.lane.b32.xlu0 %v484, 1
    %v496 = vpop.permute.xlu0 %495
    %v501 = vsub.f32 %v28, %v490
    %v502 = vsub.f32 %v29, %v492
    %v503 = vsub.f32 %v30, %v494
    %v504 = vsub.f32 %v31, %v496
    %506 = vset.pattern.permute.xlu0 2
    %507 = vperm.xlu0 %506, %v477
    %v508 = vpop.permute.xlu0 %507
    %511 = vset.pattern.permute.xlu0 2
    %512 = vperm.xlu0 %511, %v478
    %v513 = vpop.permute.xlu0 %512
    %516 = vset.pattern.permute.xlu0 2
    %517 = vperm.xlu0 %516, %v479
    %v518 = vpop.permute.xlu0 %517
    %521 = vset.pattern.permute.xlu0 2
    %522 = vperm.xlu0 %521, %v480
    %v523 = vpop.permute.xlu0 %522
    %v525 = vmul.f32 %v421, %v508
    %v526 = vmul.f32 %v422, %v513
    %v527 = vmul.f32 %v423, %v518
    %v528 = vmul.f32 %v424, %v523
    %530 = vset.pattern.permute.xlu0 3
    %531 = vperm.xlu0 %530, %v501
    %v532 = vpop.permute.xlu0 %531
    %535 = vset.pattern.permute.xlu0 3
    %536 = vperm.xlu0 %535, %v502
    %v537 = vpop.permute.xlu0 %536
    %540 = vset.pattern.permute.xlu0 3
    %541 = vperm.xlu0 %540, %v503
    %v542 = vpop.permute.xlu0 %541
    %545 = vset.pattern.permute.xlu0 3
    %546 = vperm.xlu0 %545, %v504
    %v547 = vpop.permute.xlu0 %546
    %v549 = vadd.f32 %v525, %v532
    %v550 = vadd.f32 %v526, %v537
    %v551 = vadd.f32 %v527, %v542
    %v552 = vadd.f32 %v528, %v547
    %553 = vmatprep.subr.mxu0 0.0
    %554 = vmatpush1.msra.mxu0 %v549
    %555 = vmatprep.subr.mxu0 0.0
    %556 = vmatpush1.msra.mxu0 %v550
    %557 = vmatprep.subr.mxu0 0.0
    %558 = vmatpush1.msra.mxu0 %v551
    %559 = vmatprep.subr.mxu0 0.0
    %560 = vmatpush1.msra.mxu0 %v552
    %561 = vmatprep.subr.mxu0 0.0
    %562 = vmatpush1.msra.mxu0 0.0
    %563 = vmatprep.subr.mxu0 0.0
    %564 = vmatpush1.msra.mxu0 0.0
    %565 = vmatprep.subr.mxu0 0.0
    %566 = vmatpush1.msra.mxu0 0.0
    %567 = vmatprep.subr.mxu0 0.0
    %568 = vmatpush1.msra.mxu0 0.0
    %569 = vmatprep.subr.mxu0 0.0
    %570 = vmatpush1.msra.mxu0 0.0
    %571 = vmatprep.subr.mxu0 0.0
    %572 = vmatpush1.msra.mxu0 0.0
    %573 = vmatprep.subr.mxu0 0.0
    %574 = vmatpush1.msra.mxu0 0.0
    %575 = vmatprep.subr.mxu0 0.0
    %576 = vmatpush1.msra.mxu0 0.0
    %577 = vmatprep.subr.mxu0 0.0
    %578 = vmatpush1.msra.mxu0 0.0
    %579 = vmatprep.subr.mxu0 0.0
    %580 = vmatpush1.msra.mxu0 0.0
    %581 = vmatprep.subr.mxu0 0.0
    %582 = vmatpush1.msra.mxu0 0.0
    %583 = vmatprep.subr.mxu0 0.0
    %584 = vmatpush1.msra.mxu0 0.0
    %585 = vmatprep.subr.mxu0 0.0
    %586 = vmatpush1.msra.mxu0 0.0
    %587 = vmatprep.subr.mxu0 0.0
    %588 = vmatpush1.msra.mxu0 0.0
    %589 = vmatprep.subr.mxu0 0.0
    %590 = vmatpush1.msra.mxu0 0.0
    %591 = vmatprep.subr.mxu0 0.0
    %592 = vmatpush1.msra.mxu0 0.0
    %593 = vmatprep.subr.mxu0 0.0
    %594 = vmatpush1.msra.mxu0 0.0
    %595 = vmatprep.subr.mxu0 0.0
    %596 = vmatpush1.msra.mxu0 0.0
    %597 = vmatprep.subr.mxu0 0.0
    %598 = vmatpush1.msra.mxu0 0.0
    %599 = vmatprep.subr.mxu0 0.0
    %600 = vmatpush1.msra.mxu0 0.0
    %601 = vmatprep.subr.mxu0 0.0
    %602 = vmatpush1.msra.mxu0 0.0
    %603 = vmatprep.subr.mxu0 0.0
    %604 = vmatpush1.msra.mxu0 0.0
    %605 = vmatprep.subr.mxu0 0.0
    %606 = vmatpush1.msra.mxu0 0.0
    %607 = vmatprep.subr.mxu0 0.0
    %608 = vmatpush1.msra.mxu0 0.0
    %609 = vmatprep.subr.mxu0 0.0
    %610 = vmatpush1.msra.mxu0 0.0
    %611 = vmatprep.subr.mxu0 0.0
    %612 = vmatpush1.msra.mxu0 0.0
    %613 = vmatprep.subr.mxu0 0.0
    %614 = vmatpush1.msra.mxu0 0.0
    %615 = vmatprep.subr.mxu0 0.0
    %616 = vmatpush1.msra.mxu0 0.0
    %617 = vmatprep.mubr.f32.mxu0 0.0
    %618 = vmatmul.mubr.f32.gmra.mrb[0].mxu0 %v317
    %v619 = vpop.f32.mrb[0].mxu0
    %v620 = vadd.f32 %v157, %v619
    %v621 = vpop.f32.mrb[0].mxu0
    %622 = vmatprep.mubr.f32.mxu0 0.0
    %623 = vmatmul.mubr.f32.gmra.mrb[0].mxu0 %v320
    %v624 = vpop.f32.mrb[0].mxu0
    %v625 = vadd.f32 %v162, %v624
    %v626 = vpop.f32.mrb[0].mxu0
    %627 = vmatprep.mubr.f32.mxu0 0.0
    %628 = vmatmul.mubr.f32.gmra.mrb[0].mxu0 %v323
    %v629 = vpop.f32.mrb[0].mxu0
    %v630 = vadd.f32 %v167, %v629
    %v631 = vpop.f32.mrb[0].mxu0
    %632 = vmatprep.mubr.f32.mxu0 0.0
    %633 = vmatmul.mubr.f32.gmra.mrb[0].mxu0 %v326
    %v634 = vpop.f32.mrb[0].mxu0
    %v635 = vadd.f32 %v172, %v634
    %v636 = vpop.f32.mrb[0].mxu0
    %637 = vdwg.mxu0
    %v638 = vmax.f32 %v620, %v52
    %v639 = vmax.f32 %v625, %v53
    %v640 = vmax.f32 %v630, %v54
    %v641 = vmax.f32 %v635, %v55
    %v642 = vmin.f32 %v638, %v35
    %v643 = vmin.f32 %v639, %v40
    %v644 = vmin.f32 %v640, %v45
    %v645 = vmin.f32 %v641, %v50
    %v646 = vsub.f32 %v620, %v642
    %v647 = vsub.f32 %v625, %v643
    %v648 = vsub.f32 %v630, %v644
    %v649 = vsub.f32 %v635, %v645
    %v650 = vmul.f32 %v646, %v60
    %v651 = vmul.f32 %v647, %v60
    %v652 = vmul.f32 %v648, %v60
    %v653 = vmul.f32 %v649, %v60
    %654 = vadd.xlane.f32.xlu0 %v650
    %v655 = vpop.xlane.xlu0 %654
    %656 = vadd.xlane.f32.xlu0 %v651
    %v657 = vpop.xlane.xlu0 %656
    %658 = vadd.xlane.f32.xlu0 %v652
    %v659 = vpop.xlane.xlu0 %658
    %660 = vadd.xlane.f32.xlu0 %v653
    %v661 = vpop.xlane.xlu0 %660
    %v662 = vmul.f32 %v646, %v650
    %v663 = vmul.f32 %v647, %v651
    %v664 = vmul.f32 %v648, %v652
    %v665 = vmul.f32 %v649, %v653
    %666 = vadd.xlane.f32.xlu0 %v662
    %v667 = vpop.xlane.xlu0 %666
    %668 = vadd.xlane.f32.xlu0 %v663
    %v669 = vpop.xlane.xlu0 %668
    %670 = vadd.xlane.f32.xlu0 %v664
    %v671 = vpop.xlane.xlu0 %670
    %672 = vadd.xlane.f32.xlu0 %v665
    %v673 = vpop.xlane.xlu0 %672
    %v674 = vmul.f32 %v655, 0.125
    %v675 = vmul.f32 %v657, 0.125
    %v676 = vmul.f32 %v659, 0.125
    %v677 = vmul.f32 %v661, 0.125
    %v678 = vmul.f32 %v667, 0.125
    %v679 = vmul.f32 %v669, 0.125
    %v680 = vmul.f32 %v671, 0.125
    %v681 = vmul.f32 %v673, 0.125
    %v682 = vmul.f32 %v674, %v674
    %v683 = vmul.f32 %v675, %v675
    %v684 = vmul.f32 %v676, %v676
    %v685 = vmul.f32 %v677, %v677
    %v686 = vsub.f32 %v678, %v682
    %v687 = vsub.f32 %v679, %v683
    %v688 = vsub.f32 %v680, %v684
    %v689 = vsub.f32 %v681, %v685
    %v690 = vmax.f32 %v686, 0.0
    %v691 = vmax.f32 %v687, 0.0
    %v692 = vmax.f32 %v688, 0.0
    %v693 = vmax.f32 %v689, 0.0
    %v694 = vadd.f32 %v690, 1e-05
    %v695 = vadd.f32 %v691, 1e-05
    %v696 = vadd.f32 %v692, 1e-05
    %v697 = vadd.f32 %v693, 1e-05
    %v698 = vrsqrt.pop %v694
    %v699 = vrsqrt.pop %v695
    %v700 = vrsqrt.pop %v696
    %v701 = vrsqrt.pop %v697
    %v702 = vmul.f32 %v28, %v698
    %v703 = vmul.f32 %v29, %v699
    %v704 = vmul.f32 %v30, %v700
    %v705 = vmul.f32 %v31, %v701
    %v706 = vmul.f32 %v674, %v702
    %v707 = vmul.f32 %v675, %v703
    %v708 = vmul.f32 %v676, %v704
    %v709 = vmul.f32 %v677, %v705
    %714 = vrot.lane.b32.xlu0 %v706, 1
    %v715 = vpop.permute.xlu0 %714
    %716 = vrot.lane.b32.xlu0 %v707, 1
    %v717 = vpop.permute.xlu0 %716
    %718 = vrot.lane.b32.xlu0 %v708, 1
    %v719 = vpop.permute.xlu0 %718
    %720 = vrot.lane.b32.xlu0 %v709, 1
    %v721 = vpop.permute.xlu0 %720
    %v726 = vsub.f32 %v28, %v715
    %v727 = vsub.f32 %v29, %v717
    %v728 = vsub.f32 %v30, %v719
    %v729 = vsub.f32 %v31, %v721
    %731 = vset.pattern.permute.xlu0 2
    %732 = vperm.xlu0 %731, %v702
    %v733 = vpop.permute.xlu0 %732
    %736 = vset.pattern.permute.xlu0 2
    %737 = vperm.xlu0 %736, %v703
    %v738 = vpop.permute.xlu0 %737
    %741 = vset.pattern.permute.xlu0 2
    %742 = vperm.xlu0 %741, %v704
    %v743 = vpop.permute.xlu0 %742
    %746 = vset.pattern.permute.xlu0 2
    %747 = vperm.xlu0 %746, %v705
    %v748 = vpop.permute.xlu0 %747
    %v750 = vmul.f32 %v646, %v733
    %v751 = vmul.f32 %v647, %v738
    %v752 = vmul.f32 %v648, %v743
    %v753 = vmul.f32 %v649, %v748
    %755 = vset.pattern.permute.xlu0 3
    %756 = vperm.xlu0 %755, %v726
    %v757 = vpop.permute.xlu0 %756
    %760 = vset.pattern.permute.xlu0 3
    %761 = vperm.xlu0 %760, %v727
    %v762 = vpop.permute.xlu0 %761
    %765 = vset.pattern.permute.xlu0 3
    %766 = vperm.xlu0 %765, %v728
    %v767 = vpop.permute.xlu0 %766
    %770 = vset.pattern.permute.xlu0 3
    %771 = vperm.xlu0 %770, %v729
    %v772 = vpop.permute.xlu0 %771
    %v774 = vadd.f32 %v750, %v757
    %v775 = vadd.f32 %v751, %v762
    %v776 = vadd.f32 %v752, %v767
    %v777 = vadd.f32 %v753, %v772
    %778 = vst [vmem:[#allocation2] sm:$0xff] %v774
    %779 = vst [vmem:[#allocation2 + $0x8] sm:$0xff] %v775
    %780 = vst [vmem:[#allocation2 + $0x10] sm:$0xff] %v776
    %781 = vst [vmem:[#allocation2 + $0x18] sm:$0xff] %v777
    // Predicated region
    $region18: #{tpu_custom_call.1} parent=1 // pred_check
      _
    $region19: #{tpu_custom_call.1} parent=1 // pred_check_branch
      %783 = sbr.rel (0) target = $region21
    $region20: #{tpu_custom_call.1} parent=1 // pred_region
      %s785 = ssub.s32 512, 512
      %786 = vsyncadd [#allocation3], %s785
      %s787 = sshll.u32 [#allocation2], 4
      %s788 = int_to_ptr.vmem [resolvable:$true] %s787
      %793 = dma.vmem_to_hbm [thread:$0]  %s788, 512, %s4, [#allocation3], 128, 128, 8
    $region21: #{tpu_custom_call.1} parent=1 // pred_fallthru
      _
    // Predicated region
    $region22: #{tpu_custom_call.1} parent=1 // pred_check
      _
    $region23: #{tpu_custom_call.1} parent=1 // pred_check_branch
      %795 = sbr.rel (0) target = $region25
    $region24: #{tpu_custom_call.1} parent=1 // pred_region
      %796 = dma.done [#allocation3], 512
    $region25: #{tpu_custom_call.1} parent=1 // pred_fallthru
      _
    %797 = vsyncpa [#allocation3], 1

</llo_original>
